<compile_context>
chip_gen: v7x
topology: tpu7x:2x2x1
jax: 0.10.0
libtpu: 0.0.40
codegen_flags: <defaults>
</compile_context>

<pallas_src>
import jax
import jax.numpy as jnp
from jax.experimental import pallas as pl
from jax.experimental.pallas import tpu as pltpu


# ----------------------------------------------------------------------------
# VMEM limit (per-chip) and tile selection helpers
# ----------------------------------------------------------------------------
def _default_vmem_limit():
    # v5e/v6e: 128 MiB physical VMEM -> allow 64 MiB scoped.
    # v7x:      64 MiB physical VMEM -> keep 32 MiB scoped.
    try:
        cap = pltpu.get_tpu_info().vmem_capacity_bytes
    except Exception:  # interpret mode / older jax: conservative default
        return 32 * 1024 * 1024
    return int(min(64 * 1024 * 1024, max(32 * 1024 * 1024, cap // 2)))


_VMEM_LIMIT = _default_vmem_limit()


def _round_up(x, m):
    return ((x + m - 1) // m) * m


def _pick_tile(dim, preferred, align):
    """Return (tile, padded_dim). Prefers a tile that divides dim exactly
    (no pad/slice copies); otherwise pads dim up to a tile multiple."""
    if dim % align == 0:
        c = min(preferred, dim)
        c -= c % align
        while c >= align:
            if dim % c == 0:
                return c, dim
            c -= align
    if dim >= preferred:
        return preferred, _round_up(dim, preferred)
    t = _round_up(dim, align)
    return t, t


def _pick_row_tile(m, c, n_streams):
    """Row tile for (M, C) elementwise kernels: large but VMEM-bounded,
    16-aligned (bf16 packs two rows per sublane), >=2 grid steps if possible."""
    budget = 8 * 1024 * 1024                       # streamed, double-buffered
    cap = budget // max(1, n_streams * 2 * c * 4)
    pref = max(16, min(1024, (cap // 16) * 16))
    align = 16 if m % 16 == 0 else 8
    tile, mp = _pick_tile(m, pref, align)
    # v7x: give both TensorCores work when the grid would otherwise be 1 step.
    if mp // tile == 1 and tile >= 2 * align and (tile // 2) % align == 0:
        tile //= 2
    return tile, mp


def _lane_fold(m, c):
    """Fold factor f so that (M, C) -> (M/f, f*C) is lane-dense (f*C % 128 == 0)."""
    if c % 128 == 0:
        return 1
    if 128 % c == 0:
        f = 128 // c
        if m % f == 0:
            return f
    return 1


# ----------------------------------------------------------------------------
# Pallas kernels
# ----------------------------------------------------------------------------
def matmul_stats_kernel(a_ref, b_ref, o_ref, stat_ref, acc_ref):
    """bf16 x bf16 GEMM tile, f32 accumulator, K innermost reduction axis.
    Epilogue (last K step) also emits per-tile BN stats [sum; sumsq]."""
    @pl.when(pl.program_id(2) == 0)
    def _zero():
        acc_ref[...] = jnp.zeros_like(acc_ref)

    acc_ref[...] += jnp.dot(a_ref[...], b_ref[...],
                            preferred_element_type=jnp.float32)

    @pl.when(pl.program_id(2) == pl.num_programs(2) - 1)
    def _store():
        acc = acc_ref[...]
        o_ref[...] = acc.astype(o_ref.dtype)
        s = jnp.sum(acc, axis=0, keepdims=True)
        sq = jnp.sum(acc * acc, axis=0, keepdims=True)
        stat_ref[...] = jnp.concatenate([s, sq], axis=0).reshape(stat_ref.shape)


def bn_act_kernel(x_ref, p_ref, o_ref):
    """y = LeakyReLU_{0.2}(x * scale + shift); p packs [scale; shift] as (2, C)."""
    p = p_ref[...]
    y = x_ref[...].astype(jnp.float32) * p[0:1, :] + p[1:2, :]
    o_ref[...] = jnp.where(y >= 0, y, 0.2 * y).astype(o_ref.dtype)


def bn_merge_kernel(a_ref, b_ref, p_ref, o_ref):
    """Fused BN+LeakyReLU of both branches + (a + b) / 2 merge.
    p packs [scale_a; shift_a; scale_b; shift_b] as (4, C)."""
    p = p_ref[...]
    ya = a_ref[...].astype(jnp.float32) * p[0:1, :] + p[1:2, :]
    ya = jnp.where(ya >= 0, ya, 0.2 * ya)
    yb = b_ref[...].astype(jnp.float32) * p[2:3, :] + p[3:4, :]
    yb = jnp.where(yb >= 0, yb, 0.2 * yb)
    o_ref[...] = ((ya + yb) * 0.5).astype(o_ref.dtype)


# ----------------------------------------------------------------------------
# Pallas wrappers
# ----------------------------------------------------------------------------
def pallas_matmul_stats(a, b, out_dtype=jnp.bfloat16):
    """a:(M,K) @ b:(K,N) -> ((M,N) out, (2,N) [sum; sumsq] over M).
    bf16 MXU inputs, f32 accumulation, K-tiled; BN stats fused into epilogue."""
    M, K = a.shape
    K2, N = b.shape
    assert K == K2
    tm, Mp = _pick_tile(M, 256, 16)     # 16-aligned for bf16 sublane packing
    tn, Np = _pick_tile(N, 256, 128)    # lane-dense output tile
    tk, Kp = _pick_tile(K, 1024, 128)   # deep K block -> fewer DMA restarts

    gm, gn = Mp // tm, Np // tn
    # v7x: both TensorCores need work — ensure >=2 steps on a parallel axis.
    if gm * gn == 1 and tm >= 32 and (tm // 2) % 16 == 0:
        tm //= 2
        gm = Mp // tm
    gk = Kp // tk

    a_p = a.astype(jnp.bfloat16)
    if (Mp, Kp) != (M, K):
        a_p = jnp.pad(a_p, ((0, Mp - M), (0, Kp - K)))
    b_p = b.astype(jnp.bfloat16)
    if (Kp, Np) != (K, N):
        b_p = jnp.pad(b_p, ((0, Kp - K), (0, Np - N)))

    out, stat = pl.pallas_call(
        matmul_stats_kernel,
        out_shape=(jax.ShapeDtypeStruct((Mp, Np), out_dtype),
                   jax.ShapeDtypeStruct((gm, 2, Np), jnp.float32)),
        grid_spec=pltpu.PrefetchScalarGridSpec(
            num_scalar_prefetch=0,
            grid=(gm, gn, gk),
            in_specs=[pl.BlockSpec((tm, tk), lambda i, j, k: (i, k)),
                      pl.BlockSpec((tk, tn), lambda i, j, k: (k, j))],
            out_specs=[pl.BlockSpec((tm, tn), lambda i, j, k: (i, j)),
                       pl.BlockSpec((1, 2, tn), lambda i, j, k: (i, 0, j))],
            scratch_shapes=[pltpu.VMEM((tm, tn), jnp.float32)]),
        compiler_params=pltpu.CompilerParams(
            dimension_semantics=("parallel", "parallel", "arbitrary"),
            vmem_limit_bytes=_VMEM_LIMIT),
    )(a_p, b_p)

    stats = stat.sum(axis=0)                 # (2, Np): tiny cross-tile reduce
    if Np != N:                              # padded cols are exact zeros
        out = out[:, :N]
        stats = stats[:, :N]
    if Mp != M:                              # padded rows are exact zeros
        out = out[:M]
    return out, stats


def pallas_bn_lrelu(y, scale, shift, out_dtype=jnp.bfloat16):
    """Per-channel scale*x+shift + LeakyReLU(0.2), tiled over rows, lane-dense."""
    M, C = y.shape
    f = _lane_fold(M, C)
    Mf, Cf = M // f, C * f
    yf = y.reshape(Mf, Cf)                               # free row-major reshape
    p = jnp.stack([jnp.tile(scale, (f,)), jnp.tile(shift, (f,))]).astype(jnp.float32)

    tm, Mp = _pick_row_tile(Mf, Cf, 2)
    yp = jnp.pad(yf, ((0, Mp - Mf), (0, 0))) if Mp != Mf else yf
    out = pl.pallas_call(
        bn_act_kernel,
        out_shape=jax.ShapeDtypeStruct((Mp, Cf), out_dtype),
        grid=(Mp // tm,),
        in_specs=[pl.BlockSpec((tm, Cf), lambda i: (i, 0)),
                  pl.BlockSpec((2, Cf), lambda i: (0, 0))],
        out_specs=pl.BlockSpec((tm, Cf), lambda i: (i, 0)),
        compiler_params=pltpu.CompilerParams(
            dimension_semantics=("parallel",),
            vmem_limit_bytes=_VMEM_LIMIT),
    )(yp, p)
    if Mp != Mf:  # padded rows hold scale*0+shift garbage -> must be sliced off
        out = out[:Mf]
    return out.reshape(M, C)


def pallas_bn_lrelu_merge(a, b, sa, ta, sb, tb, out_dtype=jnp.float32):
    """Fused BN+LeakyReLU of both branches + (a+b)/2 merge, lane-dense rows."""
    M, C = a.shape
    f = _lane_fold(M, C)
    Mf, Cf = M // f, C * f
    af, bf = a.reshape(Mf, Cf), b.reshape(Mf, Cf)
    p = jnp.stack([jnp.tile(sa, (f,)), jnp.tile(ta, (f,)),
                   jnp.tile(sb, (f,)), jnp.tile(tb, (f,))]).astype(jnp.float32)

    tm, Mp = _pick_row_tile(Mf, Cf, 3)
    if Mp != Mf:
        af = jnp.pad(af, ((0, Mp - Mf), (0, 0)))
        bf = jnp.pad(bf, ((0, Mp - Mf), (0, 0)))
    out = pl.pallas_call(
        bn_merge_kernel,
        out_shape=jax.ShapeDtypeStruct((Mp, Cf), out_dtype),
        grid=(Mp // tm,),
        in_specs=[pl.BlockSpec((tm, Cf), lambda i: (i, 0)),
                  pl.BlockSpec((tm, Cf), lambda i: (i, 0)),
                  pl.BlockSpec((4, Cf), lambda i: (0, 0))],
        out_specs=pl.BlockSpec((tm, Cf), lambda i: (i, 0)),
        compiler_params=pltpu.CompilerParams(
            dimension_semantics=("parallel",),
            vmem_limit_bytes=_VMEM_LIMIT),
    )(af, bf, p)
    if Mp != Mf:
        out = out[:Mf]
    return out.reshape(M, C)


def bn_scale_shift(stats, count, gamma, beta, eps=1e-5):
    """Fold batch mean/var (training-mode, biased) + gamma/beta into scale/shift.
    Note: one-pass var = E[x^2]-E[x]^2 in f32; clamped at 0 to guard cancellation."""
    mean = stats[0] / count
    var = jnp.maximum(stats[1] / count - mean * mean, 0.0)
    scale = gamma * jax.lax.rsqrt(var + eps)
    shift = beta - mean * scale
    return scale.astype(jnp.float32), shift.astype(jnp.float32)


# ----------------------------------------------------------------------------
# Glue: im2col, weight packing, spectral norm, parameter init (plain JAX)
# ----------------------------------------------------------------------------
def im2col(x_nhwc, kh, kw, stride, pad, dtype=jnp.bfloat16):
    """x: (N,H,W,Cin) -> (N*Ho*Wo, kh*kw*Cin) in bf16, patch order (kh, kw, cin)."""
    # TODO(synk): move patch extraction into the GEMM kernel (tap grid axis with
    # shifted-window index_map / manual DMA) to avoid the kh*kw HBM expansion.
    N, H, W, Cin = x_nhwc.shape
    xp = jnp.pad(x_nhwc.astype(dtype), ((0, 0), (pad, pad), (pad, pad), (0, 0)))
    Ho = (H + 2 * pad - kh) // stride + 1
    Wo = (W + 2 * pad - kw) // stride + 1
    cols = jnp.concatenate(
        [xp[:, i:i + stride * Ho:stride, j:j + stride * Wo:stride, :]
         for i in range(kh) for j in range(kw)], axis=-1)
    return cols.reshape(N * Ho * Wo, kh * kw * Cin), (N, Ho, Wo)


def weight_to_gemm(w_oihw):
    """(Cout, Cin, KH, KW) -> (KH*KW*Cin, Cout) matching im2col ordering."""
    Cout, Cin, KH, KW = w_oihw.shape
    return jnp.transpose(w_oihw, (2, 3, 1, 0)).reshape(KH * KW * Cin, Cout)


def spectral_normalize(w, key, n_iter=1, eps=1e-12):
    """Mimics torch spectral_norm's power iteration (deterministic u init)."""
    cout = w.shape[0]
    wm = w.reshape(cout, -1)
    u = jax.random.normal(key, (cout,), dtype=jnp.float32)
    u = u / (jnp.linalg.norm(u) + eps)
    v = None
    for _ in range(n_iter):
        v = wm.T @ u
        v = v / (jnp.linalg.norm(v) + eps)
        u = wm @ v
        u = u / (jnp.linalg.norm(u) + eps)
    sigma = u @ (wm @ v)
    return w / sigma


def init_params(key, in_planes, out_planes):
    k = jax.random.split(key, 6)
    w1 = 0.1 * jax.random.normal(k[0], (out_planes, in_planes, 4, 4), jnp.float32)
    w2 = 0.1 * jax.random.normal(k[1], (out_planes, out_planes, 3, 3), jnp.float32)
    w3 = 0.1 * jax.random.normal(k[2], (out_planes, in_planes, 1, 1), jnp.float32)
    w1 = spectral_normalize(w1, k[3])
    w2 = spectral_normalize(w2, k[4])
    w3 = spectral_normalize(w3, k[5])
    ones = jnp.ones((out_planes,), jnp.float32)
    zeros = jnp.zeros((out_planes,), jnp.float32)
    return dict(w1=w1, w2=w2, w3=w3,
                g1=ones, b1=zeros, g2=ones, b2=zeros, g3=ones, b3=zeros)


# ----------------------------------------------------------------------------
# DownBlockComp forward (Pallas-backed)
# ----------------------------------------------------------------------------
def down_block_comp(x_nchw, params):
    x = jnp.transpose(x_nchw, (0, 2, 3, 1)).astype(jnp.float32)  # NCHW -> NHWC
    N, H, W, Cin = x.shape
    Cout = params["w1"].shape[0]
    Ho, Wo = H // 2, W // 2
    M = N * Ho * Wo

    # ---- main: conv 4x4 s2 p1 (GEMM w/ fused stats) -> BN -> LeakyReLU ----
    cols1, _ = im2col(x, 4, 4, 2, 1)
    y1, st1 = pallas_matmul_stats(cols1, weight_to_gemm(params["w1"]),
                                  out_dtype=jnp.bfloat16)
    scale1, shift1 = bn_scale_shift(st1, M, params["g1"], params["b1"])
    y1a = pallas_bn_lrelu(y1, scale1, shift1, out_dtype=jnp.bfloat16)

    # ---- main: conv 3x3 s1 p1 (BN+LReLU deferred to the fused merge) ----
    cols2, _ = im2col(y1a.reshape(N, Ho, Wo, Cout), 3, 3, 1, 1)
    y2, st2 = pallas_matmul_stats(cols2, weight_to_gemm(params["w2"]),
                                  out_dtype=jnp.bfloat16)
    scale2, shift2 = bn_scale_shift(st2, M, params["g2"], params["b2"])

    # ---- direct: AvgPool2d(2,2) + 1x1 conv folded into one GEMM ----
    # space-to-depth (pure layout): (N,H,W,Cin) -> (M, 4*Cin), tap order (di,dj)
    x_s2d = x.reshape(N, Ho, 2, Wo, 2, Cin).transpose(0, 1, 3, 2, 4, 5)
    x_s2d = x_s2d.reshape(M, 4 * Cin).astype(jnp.bfloat16)
    w3 = weight_to_gemm(params["w3"])                       # (Cin, Cout)
    w3_pool = jnp.tile(w3, (4, 1)) * 0.25                   # mean over 2x2 window
    d, st3 = pallas_matmul_stats(x_s2d, w3_pool, out_dtype=jnp.bfloat16)
    scale3, shift3 = bn_scale_shift(st3, M, params["g3"], params["b3"])

    # ---- fused epilogue: BN+LReLU(main), BN+LReLU(direct), (a+b)/2 ----
    out = pallas_bn_lrelu_merge(y2, d, scale2, shift2, scale3, shift3,
                                out_dtype=jnp.float32)
    out = out.reshape(N, Ho, Wo, Cout)
    return jnp.transpose(out, (0, 3, 1, 2))  # NHWC -> NCHW (match PyTorch)


# ----------------------------------------------------------------------------
# Pure-JAX reference (for verification)
# ----------------------------------------------------------------------------
def _bn_lrelu_ref(y_nchw, g, b):
    mean = y_nchw.mean(axis=(0, 2, 3), keepdims=True)
    var = ((y_nchw - mean) ** 2).mean(axis=(0, 2, 3), keepdims=True)
    y = (y_nchw - mean) * jax.lax.rsqrt(var + 1e-5)
    y = y * g[None, :, None, None] + b[None, :, None, None]
    return jnp.where(y >= 0, y, 0.2 * y)


def reference_forward(x_nchw, params):
    conv = lambda x, w, s, p: jax.lax.conv_general_dilated(
        x, w, (s, s), [(p, p), (p, p)],
        dimension_numbers=("NCHW", "OIHW", "NCHW"),
        precision=jax.lax.Precision.HIGHEST)
    y = conv(x_nchw, params["w1"], 2, 1)
    y = _bn_lrelu_ref(y, params["g1"], params["b1"])
    y = conv(y, params["w2"], 1, 1)
    y = _bn_lrelu_ref(y, params["g2"], params["b2"])
    N, C, H, W = x_nchw.shape
    pooled = x_nchw.reshape(N, C, H // 2, 2, W // 2, 2).mean(axis=(3, 5))
    d = conv(pooled, params["w3"], 1, 0)
    d = _bn_lrelu_ref(d, params["g3"], params["b3"])
    return (y + d) / 2


# ----------------------------------------------------------------------------
if __name__ == "__main__":
    key = jax.random.PRNGKey(0)
    k_x, k_p = jax.random.split(key)

    N, Cin, H, W = 2, 4, 16, 16
    Cout = 8
    x = jax.random.normal(k_x, (N, Cin, H, W), dtype=jnp.float32)
    params = init_params(k_p, Cin, Cout)

    fwd = jax.jit(down_block_comp)
    out = jax.block_until_ready(fwd(x, params))
    assert out.shape == (N, Cout, H // 2, W // 2), out.shape

    ref = jax.block_until_ready(reference_forward(x, params))
    # bf16 MXU inputs + bf16 intermediates (f32 accumulation/stats) -> looser tol.
    max_err = float(jnp.max(jnp.abs(out - ref)))
    assert jnp.allclose(out, ref, atol=6e-2, rtol=6e-2), max_err

    print("KERNEL_OK")
</pallas_src>

<mosaic_0001>
module attributes {stable_mosaic.version = 11 : i64} {
  func.func @bn_act_kernel(%arg0: i32, %arg1: memref<8x128xbf16, #tpu.memory_space<vmem>>, %arg2: memref<2x128xf32, #tpu.memory_space<vmem>>, %arg3: memref<8x128xbf16, #tpu.memory_space<vmem>>) attributes {dimension_semantics = [#tpu.dimension_semantics<parallel>], iteration_bounds = array<i64: 1>, scalar_prefetch = 0 : i64, scratch_operands = 0 : i64, tpu.core_type = #tpu.core_type<tc>, window_params = [{transform_indices = @transform_0, window_bounds = array<i64: 8, 128>}, {pipeline_mode = #tpu.pipeline_mode<synchronous>, transform_indices = @transform_1, window_bounds = array<i64: 2, 128>}, {transform_indices = @transform_2, window_bounds = array<i64: 8, 128>}]} {
    %c0 = arith.constant 0 : index
    %c0_0 = arith.constant 0 : index
    %0 = vector.load %arg2[%c0, %c0_0] : memref<2x128xf32, #tpu.memory_space<vmem>>, vector<2x128xf32>
    %c0_1 = arith.constant 0 : index
    %c0_2 = arith.constant 0 : index
    %1 = vector.load %arg1[%c0_1, %c0_2] : memref<8x128xbf16, #tpu.memory_space<vmem>>, vector<8x128xbf16>
    %2 = arith.extf %1 : vector<8x128xbf16> to vector<8x128xf32>
    %3 = vector.extract_strided_slice %0 {offsets = [0, 0], sizes = [1, 128], strides = [1, 1]} : vector<2x128xf32> to vector<1x128xf32>
    %4 = vector.broadcast %3 : vector<1x128xf32> to vector<8x128xf32>
    %5 = arith.mulf %2, %4 : vector<8x128xf32>
    %6 = vector.extract_strided_slice %0 {offsets = [1, 0], sizes = [1, 128], strides = [1, 1]} : vector<2x128xf32> to vector<1x128xf32>
    %7 = vector.broadcast %6 : vector<1x128xf32> to vector<8x128xf32>
    %8 = arith.addf %5, %7 : vector<8x128xf32>
    %cst = arith.constant 0.000000e+00 : f32
    %9 = vector.broadcast %cst : f32 to vector<8x128xf32>
    %10 = arith.cmpf oge, %8, %9 : vector<8x128xf32>
    %cst_3 = arith.constant 2.000000e-01 : f32
    %11 = vector.broadcast %cst_3 : f32 to vector<8x128xf32>
    %12 = arith.mulf %11, %8 : vector<8x128xf32>
    %13 = arith.select %10, %8, %12 : vector<8x128xi1>, vector<8x128xf32>
    %14 = arith.truncf %13 : vector<8x128xf32> to vector<8x128xbf16>
    %c0_4 = arith.constant 0 : index
    %c0_5 = arith.constant 0 : index
    %15 = vector.load %arg3[%c0_4, %c0_5] : memref<8x128xbf16, #tpu.memory_space<vmem>>, vector<8x128xbf16>
    tpu.vector_store %arg3[%c0_4, %c0_5], %14 {strides = array<i32>} : memref<8x128xbf16, #tpu.memory_space<vmem>>, vector<8x128xbf16>,
    return
  }
  func.func @transform_0(%arg0: i32) -> (i32, i32) {
    %c0_i32 = arith.constant 0 : i32
    %c0_i32_0 = arith.constant 0 : i32
    return %arg0, %c0_i32 : i32, i32
  }
  func.func @transform_1(%arg0: i32) -> (i32, i32) {
    %c0_i32 = arith.constant 0 : i32
    %c0_i32_0 = arith.constant 0 : i32
    %c0_i32_1 = arith.constant 0 : i32
    return %c0_i32, %c0_i32_0 : i32, i32
  }
  func.func @transform_2(%arg0: i32) -> (i32, i32) {
    %c0_i32 = arith.constant 0 : i32
    %c0_i32_0 = arith.constant 0 : i32
    return %arg0, %c0_i32 : i32, i32
  }
}

module attributes {stable_mosaic.version = 11 : i64} {
  func.func @matmul_stats_kernel(%arg0: i32, %arg1: i32, %arg2: i32, %arg3: memref<64x128xbf16, #tpu.memory_space<vmem>>, %arg4: memref<128x128xbf16, #tpu.memory_space<vmem>>, %arg5: memref<64x128xbf16, #tpu.memory_space<vmem>>, %arg6: memref<1x2x128xf32, #tpu.memory_space<vmem>>, %arg7: memref<64x128xf32, #tpu.memory_space<vmem>>) attributes {dimension_semantics = [#tpu.dimension_semantics<parallel>, #tpu.dimension_semantics<parallel>, #tpu.dimension_semantics<arbitrary>], iteration_bounds = array<i64: 2, 1, 1>, scalar_prefetch = 0 : i64, scratch_operands = 1 : i64, tpu.core_type = #tpu.core_type<tc>, window_params = [{transform_indices = @transform_0, window_bounds = array<i64: 64, 128>}, {transform_indices = @transform_1, window_bounds = array<i64: 128, 128>}, {transform_indices = @transform_2, window_bounds = array<i64: 64, 128>}, {transform_indices = @transform_3, window_bounds = array<i64: 1, 2, 128>}]} {
    %c0_i32 = arith.constant 0 : i32
    %0 = arith.cmpi eq, %arg2, %c0_i32 : i32
    %1 = arith.extui %0 : i1 to i32
    %c0_i32_0 = arith.constant 0 : i32
    %2 = arith.cmpi ne, %1, %c0_i32_0 : i32
    scf.if %2 {
      %cst_10 = arith.constant 0.000000e+00 : f32
      %12 = vector.broadcast %cst_10 : f32 to vector<64x128xf32>
      %c0_11 = arith.constant 0 : index
      %c0_12 = arith.constant 0 : index
      %13 = vector.load %arg7[%c0_11, %c0_12] : memref<64x128xf32, #tpu.memory_space<vmem>>, vector<64x128xf32>
      tpu.vector_store %arg7[%c0_11, %c0_12], %12 {strides = array<i32>} : memref<64x128xf32, #tpu.memory_space<vmem>>, vector<64x128xf32>,
    } else {
    }
    %c0 = arith.constant 0 : index
    %c0_1 = arith.constant 0 : index
    %3 = vector.load %arg7[%c0, %c0_1] : memref<64x128xf32, #tpu.memory_space<vmem>>, vector<64x128xf32>
    %c0_2 = arith.constant 0 : index
    %c0_3 = arith.constant 0 : index
    %4 = vector.load %arg3[%c0_2, %c0_3] : memref<64x128xbf16, #tpu.memory_space<vmem>>, vector<64x128xbf16>
    %c0_4 = arith.constant 0 : index
    %c0_5 = arith.constant 0 : index
    %5 = vector.load %arg4[%c0_4, %c0_5] : memref<128x128xbf16, #tpu.memory_space<vmem>>, vector<128x128xbf16>
    %cst = arith.constant dense<0.000000e+00> : vector<64x128xf32>
    %6 = tpu.matmul %4, %5, %cst {dimension_numbers = #tpu.dot_dimension_numbers<[1], [0], [0], [1], [0, 0, 1, 1], [], []>} : vector<64x128xbf16>, vector<128x128xbf16>, vector<64x128xf32> -> vector<64x128xf32>
    %7 = arith.addf %3, %6 : vector<64x128xf32>
    %c0_6 = arith.constant 0 : index
    %c0_7 = arith.constant 0 : index
    %8 = vector.load %arg7[%c0_6, %c0_7] : memref<64x128xf32, #tpu.memory_space<vmem>>, vector<64x128xf32>
    tpu.vector_store %arg7[%c0_6, %c0_7], %7 {strides = array<i32>} : memref<64x128xf32, #tpu.memory_space<vmem>>, vector<64x128xf32>,
    %c0_i32_8 = arith.constant 0 : i32
    %9 = arith.cmpi eq, %arg2, %c0_i32_8 : i32
    %10 = arith.extui %9 : i1 to i32
    %c0_i32_9 = arith.constant 0 : i32
    %11 = arith.cmpi ne, %10, %c0_i32_9 : i32
    scf.if %11 {
      %c0_10 = arith.constant 0 : index
      %c0_11 = arith.constant 0 : index
      %12 = vector.load %arg7[%c0_10, %c0_11] : memref<64x128xf32, #tpu.memory_space<vmem>>, vector<64x128xf32>
      %13 = arith.truncf %12 : vector<64x128xf32> to vector<64x128xbf16>
      %c0_12 = arith.constant 0 : index
      %c0_13 = arith.constant 0 : index
      %14 = vector.load %arg5[%c0_12, %c0_13] : memref<64x128xbf16, #tpu.memory_space<vmem>>, vector<64x128xbf16>
      tpu.vector_store %arg5[%c0_12, %c0_13], %13 {strides = array<i32>} : memref<64x128xbf16, #tpu.memory_space<vmem>>, vector<64x128xbf16>,
      %cst_14 = arith.constant dense<0.000000e+00> : vector<128xf32>
      %15 = vector.multi_reduction <add>, %12, %cst_14 [0] : vector<64x128xf32> to vector<128xf32>
      %16 = vector.shape_cast %15 : vector<128xf32> to vector<1x128xf32>
      %17 = arith.mulf %12, %12 : vector<64x128xf32>
      %cst_15 = arith.constant dense<0.000000e+00> : vector<128xf32>
      %18 = vector.multi_reduction <add>, %17, %cst_15 [0] : vector<64x128xf32> to vector<128xf32>
      %19 = vector.shape_cast %18 : vector<128xf32> to vector<1x128xf32>
      %20 = tpu.concatenate %16, %19 in 0 : vector<1x128xf32>, vector<1x128xf32> -> vector<2x128xf32>
      %21 = vector.shape_cast %20 : vector<2x128xf32> to vector<1x2x128xf32>
      %c0_16 = arith.constant 0 : index
      %c0_17 = arith.constant 0 : index
      %c0_18 = arith.constant 0 : index
      %22 = vector.load %arg6[%c0_16, %c0_17, %c0_18] : memref<1x2x128xf32, #tpu.memory_space<vmem>>, vector<1x2x128xf32>
      tpu.vector_store %arg6[%c0_16, %c0_17, %c0_18], %21 {strides = array<i32>} : memref<1x2x128xf32, #tpu.memory_space<vmem>>, vector<1x2x128xf32>,
    } else {
    }
    return
  }
  func.func @transform_0(%arg0: i32, %arg1: i32, %arg2: i32) -> (i32, i32) {
    %c0_i32 = arith.constant 0 : i32
    return %arg0, %arg2 : i32, i32
  }
  func.func @transform_1(%arg0: i32, %arg1: i32, %arg2: i32) -> (i32, i32) {
    %c0_i32 = arith.constant 0 : i32
    return %arg2, %arg1 : i32, i32
  }
  func.func @transform_2(%arg0: i32, %arg1: i32, %arg2: i32) -> (i32, i32) {
    %c0_i32 = arith.constant 0 : i32
    return %arg0, %arg1 : i32, i32
  }
  func.func @transform_3(%arg0: i32, %arg1: i32, %arg2: i32) -> (i32, i32, i32) {
    %c0_i32 = arith.constant 0 : i32
    %c0_i32_0 = arith.constant 0 : i32
    return %arg0, %c0_i32, %arg1 : i32, i32, i32
  }
}

module attributes {stable_mosaic.version = 11 : i64} {
  func.func @bn_merge_kernel(%arg0: i32, %arg1: memref<8x128xbf16, #tpu.memory_space<vmem>>, %arg2: memref<8x128xbf16, #tpu.memory_space<vmem>>, %arg3: memref<4x128xf32, #tpu.memory_space<vmem>>, %arg4: memref<8x128xf32, #tpu.memory_space<vmem>>) attributes {dimension_semantics = [#tpu.dimension_semantics<parallel>], iteration_bounds = array<i64: 1>, scalar_prefetch = 0 : i64, scratch_operands = 0 : i64, tpu.core_type = #tpu.core_type<tc>, window_params = [{transform_indices = @transform_0, window_bounds = array<i64: 8, 128>}, {transform_indices = @transform_1, window_bounds = array<i64: 8, 128>}, {pipeline_mode = #tpu.pipeline_mode<synchronous>, transform_indices = @transform_2, window_bounds = array<i64: 4, 128>}, {transform_indices = @transform_3, window_bounds = array<i64: 8, 128>}]} {
    %c0 = arith.constant 0 : index
    %c0_0 = arith.constant 0 : index
    %0 = vector.load %arg3[%c0, %c0_0] : memref<4x128xf32, #tpu.memory_space<vmem>>, vector<4x128xf32>
    %c0_1 = arith.constant 0 : index
    %c0_2 = arith.constant 0 : index
    %1 = vector.load %arg1[%c0_1, %c0_2] : memref<8x128xbf16, #tpu.memory_space<vmem>>, vector<8x128xbf16>
    %2 = arith.extf %1 : vector<8x128xbf16> to vector<8x128xf32>
    %3 = vector.extract_strided_slice %0 {offsets = [0, 0], sizes = [1, 128], strides = [1, 1]} : vector<4x128xf32> to vector<1x128xf32>
    %4 = vector.broadcast %3 : vector<1x128xf32> to vector<8x128xf32>
    %5 = arith.mulf %2, %4 : vector<8x128xf32>
    %6 = vector.extract_strided_slice %0 {offsets = [1, 0], sizes = [1, 128], strides = [1, 1]} : vector<4x128xf32> to vector<1x128xf32>
    %7 = vector.broadcast %6 : vector<1x128xf32> to vector<8x128xf32>
    %8 = arith.addf %5, %7 : vector<8x128xf32>
    %cst = arith.constant 0.000000e+00 : f32
    %9 = vector.broadcast %cst : f32 to vector<8x128xf32>
    %10 = arith.cmpf oge, %8, %9 : vector<8x128xf32>
    %cst_3 = arith.constant 2.000000e-01 : f32
    %11 = vector.broadcast %cst_3 : f32 to vector<8x128xf32>
    %12 = arith.mulf %11, %8 : vector<8x128xf32>
    %13 = arith.select %10, %8, %12 : vector<8x128xi1>, vector<8x128xf32>
    %c0_4 = arith.constant 0 : index
    %c0_5 = arith.constant 0 : index
    %14 = vector.load %arg2[%c0_4, %c0_5] : memref<8x128xbf16, #tpu.memory_space<vmem>>, vector<8x128xbf16>
    %15 = arith.extf %14 : vector<8x128xbf16> to vector<8x128xf32>
    %16 = vector.extract_strided_slice %0 {offsets = [2, 0], sizes = [1, 128], strides = [1, 1]} : vector<4x128xf32> to vector<1x128xf32>
    %17 = vector.broadcast %16 : vector<1x128xf32> to vector<8x128xf32>
    %18 = arith.mulf %15, %17 : vector<8x128xf32>
    %19 = vector.extract_strided_slice %0 {offsets = [3, 0], sizes = [1, 128], strides = [1, 1]} : vector<4x128xf32> to vector<1x128xf32>
    %20 = vector.broadcast %19 : vector<1x128xf32> to vector<8x128xf32>
    %21 = arith.addf %18, %20 : vector<8x128xf32>
    %cst_6 = arith.constant 0.000000e+00 : f32
    %22 = vector.broadcast %cst_6 : f32 to vector<8x128xf32>
    %23 = arith.cmpf oge, %21, %22 : vector<8x128xf32>
    %cst_7 = arith.constant 2.000000e-01 : f32
    %24 = vector.broadcast %cst_7 : f32 to vector<8x128xf32>
    %25 = arith.mulf %24, %21 : vector<8x128xf32>
    %26 = arith.select %23, %21, %25 : vector<8x128xi1>, vector<8x128xf32>
    %27 = arith.addf %13, %26 : vector<8x128xf32>
    %cst_8 = arith.constant 5.000000e-01 : f32
    %28 = vector.broadcast %cst_8 : f32 to vector<8x128xf32>
    %29 = arith.mulf %27, %28 : vector<8x128xf32>
    %c0_9 = arith.constant 0 : index
    %c0_10 = arith.constant 0 : index
    %30 = vector.load %arg4[%c0_9, %c0_10] : memref<8x128xf32, #tpu.memory_space<vmem>>, vector<8x128xf32>
    tpu.vector_store %arg4[%c0_9, %c0_10], %29 {strides = array<i32>} : memref<8x128xf32, #tpu.memory_space<vmem>>, vector<8x128xf32>,
    return
  }
  func.func @transform_0(%arg0: i32) -> (i32, i32) {
    %c0_i32 = arith.constant 0 : i32
    %c0_i32_0 = arith.constant 0 : i32
    return %arg0, %c0_i32 : i32, i32
  }
  func.func @transform_1(%arg0: i32) -> (i32, i32) {
    %c0_i32 = arith.constant 0 : i32
    %c0_i32_0 = arith.constant 0 : i32
    return %arg0, %c0_i32 : i32, i32
  }
  func.func @transform_2(%arg0: i32) -> (i32, i32) {
    %c0_i32 = arith.constant 0 : i32
    %c0_i32_0 = arith.constant 0 : i32
    %c0_i32_1 = arith.constant 0 : i32
    return %c0_i32, %c0_i32_0 : i32, i32
  }
  func.func @transform_3(%arg0: i32) -> (i32, i32) {
    %c0_i32 = arith.constant 0 : i32
    %c0_i32_0 = arith.constant 0 : i32
    return %arg0, %c0_i32 : i32, i32
  }
}

</mosaic_0001>

<llo_original>
// kernel: tile.37
$region0: #{tile.37}
  #allocation0 [shape = 's32[1]{0}', space=sflag, size = 0x4, scoped, tag = 'scoped memory for tile.37']
  %s0 = inlined_call_operand.vmem [shape: f32[8], index: 0, kind: input, shape index: {}]
  %s1 = inlined_call_operand.vmem [shape: f32[16,8], index: 1, kind: output, shape index: {}]
  // Predicated region
  $region2: #{tile.37} parent=0 // pred_check
    _
  $region3: #{tile.37} parent=0 // pred_check_branch
    %3 = sbr.rel (0) target = $region5
  $region4: #{tile.37} parent=0 // pred_region
    _
  $region5: #{tile.37} parent=0 // pred_fallthru
    _
  %v4 = vld [vmem:[%s0] ss:$0 sm:$0xff]
  %5 = vst [vmem:[%s1] sm:$0xff] %v4
  %s6 = scalar_lea.vmem %s1, 8
  %7 = vst [vmem:[%s6] sm:$0xff] %v4

// kernel: tile.42
$region0: #{tile.42}
  %s0 = inlined_call_operand.vmem [shape: f32[16,8], index: 0, kind: input, shape index: {}]
  %s1 = inlined_call_operand.vmem [shape: f32[1,128], index: 1, kind: output, shape index: {}]
  $region1: #{tile.42} parent=0
    #allocation0 [shape = 'u8[4096]{0}', space=vmem, size = 0x1000, scoped, tag = 'scoped mem for output reshape']
    %v2 = vld [vmem:[%s0] sm:$0x1]
    %vm3 = vcmask 64512
    %4 = vst.msk [vmem:[#allocation0] sm:$0x1] %vm3, %v2
    %s5 = scalar_lea.vmem %s0, 15
    %v6 = vld [vmem:[%s5] sm:$0x1]
    %7 = vrot.lane.b32.xlu0 %v6, 120
    %v8 = vpop.permute.xlu0 %7
    %vm9 = vcmask 1048512
    %10 = vst.msk [vmem:[#allocation0] sm:$0x1] %vm9, %v8
    %s11 = scalar_lea.vmem %s0, 14
    %v12 = vld [vmem:[%s11] sm:$0x1]
    %13 = vrot.lane.b32.xlu0 %v12, 112
    %v14 = vpop.permute.xlu0 %13
    %vm15 = vcmask 982912
    %16 = vst.msk [vmem:[#allocation0] sm:$0x1] %vm15, %v14
    %s17 = scalar_lea.vmem %s0, 13
    %v18 = vld [vmem:[%s17] sm:$0x1]
    %19 = vrot.lane.b32.xlu0 %v18, 104
    %v20 = vpop.permute.xlu0 %19
    %vm21 = vcmask 917312
    %22 = vst.msk [vmem:[#allocation0] sm:$0x1] %vm21, %v20
    %s23 = scalar_lea.vmem %s0, 12
    %v24 = vld [vmem:[%s23] sm:$0x1]
    %25 = vrot.lane.b32.xlu0 %v24, 96
    %v26 = vpop.permute.xlu0 %25
    %vm27 = vcmask 851712
    %28 = vst.msk [vmem:[#allocation0] sm:$0x1] %vm27, %v26
    %s29 = scalar_lea.vmem %s0, 11
    %v30 = vld [vmem:[%s29] sm:$0x1]
    %31 = vrot.lane.b32.xlu0 %v30, 88
    %v32 = vpop.permute.xlu0 %31
    %vm33 = vcmask 786112
    %34 = vst.msk [vmem:[#allocation0] sm:$0x1] %vm33, %v32
    %s35 = scalar_lea.vmem %s0, 10
    %v36 = vld [vmem:[%s35] sm:$0x1]
    %37 = vrot.lane.b32.xlu0 %v36, 80
    %v38 = vpop.permute.xlu0 %37
    %vm39 = vcmask 720512
    %40 = vst.msk [vmem:[#allocation0] sm:$0x1] %vm39, %v38
    %s41 = scalar_lea.vmem %s0, 9
    %v42 = vld [vmem:[%s41] sm:$0x1]
    %43 = vrot.lane.b32.xlu0 %v42, 72
    %v44 = vpop.permute.xlu0 %43
    %vm45 = vcmask 654912
    %46 = vst.msk [vmem:[#allocation0] sm:$0x1] %vm45, %v44
    %s47 = scalar_lea.vmem %s0, 8
    %v48 = vld [vmem:[%s47] sm:$0x1]
    %49 = vrot.lane.b32.xlu0 %v48, 64
    %v50 = vpop.permute.xlu0 %49
    %vm51 = vcmask 589312
    %52 = vst.msk [vmem:[#allocation0] sm:$0x1] %vm51, %v50
    %s53 = scalar_lea.vmem %s0, 7
    %v54 = vld [vmem:[%s53] sm:$0x1]
    %55 = vrot.lane.b32.xlu0 %v54, 56
    %v56 = vpop.permute.xlu0 %55
    %vm57 = vcmask 523712
    %58 = vst.msk [vmem:[#allocation0] sm:$0x1] %vm57, %v56
    %s59 = scalar_lea.vmem %s0, 6
    %v60 = vld [vmem:[%s59] sm:$0x1]
    %61 = vrot.lane.b32.xlu0 %v60, 48
    %v62 = vpop.permute.xlu0 %61
    %vm63 = vcmask 458112
    %64 = vst.msk [vmem:[#allocation0] sm:$0x1] %vm63, %v62
    %s65 = scalar_lea.vmem %s0, 5
    %v66 = vld [vmem:[%s65] sm:$0x1]
    %67 = vrot.lane.b32.xlu0 %v66, 40
    %v68 = vpop.permute.xlu0 %67
    %vm69 = vcmask 392512
    %70 = vst.msk [vmem:[#allocation0] sm:$0x1] %vm69, %v68
    %s71 = scalar_lea.vmem %s0, 4
    %v72 = vld [vmem:[%s71] sm:$0x1]
    %73 = vrot.lane.b32.xlu0 %v72, 32
    %v74 = vpop.permute.xlu0 %73
    %vm75 = vcmask 326912
    %76 = vst.msk [vmem:[#allocation0] sm:$0x1] %vm75, %v74
    %s77 = scalar_lea.vmem %s0, 3
    %v78 = vld [vmem:[%s77] sm:$0x1]
    %79 = vrot.lane.b32.xlu0 %v78, 24
    %v80 = vpop.permute.xlu0 %79
    %vm81 = vcmask 261312
    %82 = vst.msk [vmem:[#allocation0] sm:$0x1] %vm81, %v80
    %s83 = scalar_lea.vmem %s0, 2
    %v84 = vld [vmem:[%s83] sm:$0x1]
    %85 = vrot.lane.b32.xlu0 %v84, 16
    %v86 = vpop.permute.xlu0 %85
    %vm87 = vcmask 195712
    %88 = vst.msk [vmem:[#allocation0] sm:$0x1] %vm87, %v86
    %s89 = scalar_lea.vmem %s0, 1
    %v90 = vld [vmem:[%s89] sm:$0x1]
    %91 = vrot.lane.b32.xlu0 %v90, 8
    %v92 = vpop.permute.xlu0 %91
    %vm93 = vcmask 130112
    %94 = vst.msk [vmem:[#allocation0] sm:$0x1] %vm93, %v92
    %s96 = sshllo.u32 0, 1
    %v98 = vld [vmem:[#allocation0] sm:%s96]
    %s99 = sshllo.u32 0, 1
    %100 = vst [vmem:[%s1] sm:%s99] %v98

// kernel: down_block_comp.6
$region0: #{down_block_comp.6}
  #allocation0 [shape = 'u32[]', space=smem, size = 0x4, offset = 0x4, fixed_abs, tag = 'smem constant byte address 0x4 - core index']
  #allocation1 [shape = 'u32[144,128]{1,0:T(1,128)}', space=vmem, size = 0x12000, scoped, tag = 'internal scratch']
  %s0 = inlined_call_operand.vmem [shape: bf16[8,128], index: 0, kind: input, shape index: {}]
  %s1 = inlined_call_operand.vmem [shape: f32[2,128], index: 1, kind: input, shape index: {}]
  %s2 = inlined_call_operand.vmem [shape: bf16[8,128], index: 2, kind: output, shape index: {}]
  %s3 = sld [smem:[#allocation0]]
  $region18: #{down_block_comp.6} parent=0
    _
  %s5 = ssub.s32 1, %s3
  %s6 = scalar_select 0, %s5, %s3
  // Predicated region
  $region2: #{down_block_comp.6} parent=0 // pred_check
    _
  $region3: #{down_block_comp.6} parent=0 // pred_check_branch
    %8 = sbr.rel (0) target = $region5
  $region4: #{down_block_comp.6} parent=0 // pred_region
    _
  $region5: #{down_block_comp.6} parent=0 // pred_fallthru
    _
  // Predicated region
  $region6: #{down_block_comp.6} parent=0 // pred_check
    _
  $region7: #{down_block_comp.6} parent=0 // pred_check_branch
    %10 = sbr.rel (0) target = $region9
  $region8: #{down_block_comp.6} parent=0 // pred_region
    _
  $region9: #{down_block_comp.6} parent=0 // pred_fallthru
    _
  %v11 = vld [vmem:[%s1] sm:$0x3]
  %v12 = vld [vmem:[%s0] sm:$0xf]
  %v13 = vunpack.c.l.bf16 %v12
  %v14 = vlaneseq
  %v15 = vshrl.u32 %v14, 7
  %v16 = vsub.s32 0, %v15
  %v17 = vrot.slane %v11, %v16
  %v18 = vmul.f32 %v13, %v17
  %v19 = vlaneseq
  %v20 = vshrl.u32 %v19, 7
  %v21 = vsub.s32 1, %v20
  %v22 = vrot.slane %v11, %v21
  %v23 = vadd.f32 %v18, %v22
  %vm24 = vcmp.ge.f32.partialorder %v23, 0.0
  %v25 = vmul.f32 %v23, 0.2
  %v26 = vsel %vm24, %v23, %v25
  %v27 = vpack.c.bf16 %v26, %v26
  %28 = vst [vmem:[%s2] sm:$0xf] %v27
  // Predicated region
  $region10: #{down_block_comp.6} parent=0 // pred_check
    _
  $region11: #{down_block_comp.6} parent=0 // pred_check_branch
    %30 = sbr.rel (0) target = $region13
  $region12: #{down_block_comp.6} parent=0 // pred_region
    _
  $region13: #{down_block_comp.6} parent=0 // pred_fallthru
    _
  // Predicated region
  $region14: #{down_block_comp.6} parent=0 // pred_check
    _
  $region15: #{down_block_comp.6} parent=0 // pred_check_branch
    %32 = sbr.rel (0) target = $region17
  $region16: #{down_block_comp.6} parent=0 // pred_region
    _
  $region17: #{down_block_comp.6} parent=0 // pred_fallthru
    _

// kernel: down_block_comp.5
$region0: #{down_block_comp.5}
  #allocation0 [shape = 'u32[]', space=smem, size = 0x4, offset = 0x4, fixed_abs, tag = 'smem constant byte address 0x4 - core index']
  #allocation1 [shape = 'u32[144,128]{1,0:T(1,128)}', space=vmem, size = 0x12000, scoped, tag = 'internal scratch']
  #allocation2 [shape = 'f32[64,128]{1,0:T(8,128)}', space=vmem, size = 0x8000, scoped, tag = 'scratch operand']
  %s0 = inlined_call_operand.vmem [shape: bf16[128,128], index: 0, kind: input, shape index: {}]
  %s1 = inlined_call_operand.vmem [shape: bf16[128,128], index: 1, kind: input, shape index: {}]
  %s2 = inlined_call_operand.vmem [shape: bf16[128,128], index: 2, kind: output, shape index: {0}]
  %s3 = inlined_call_operand.vmem [shape: f32[2,2,128], index: 3, kind: output, shape index: {1}]
  %4 = xla_tuple %s2, %s3
  %s5 = sld [smem:[#allocation0]]
  $region57: #{down_block_comp.5} parent=0
    _
  %s7 = ssub.s32 1, %s5
  %s8 = scalar_select 0, %s7, %s5
  loop: start=0, step=1, limit=4
  $region2: #{down_block_comp.5} parent=0 // loop_pre_header
    _
  $region3: #{down_block_comp.5} parent=0 // loop_header
    %s10 = sphi 0, %s14
    %p11 = scmp.ge.s32.totalorder %s10, 4
    %s17 = sphi 0, %s36
    %s18 = sphi 0, %s32
    %s19 = sphi 0, %s28
    %s20 = sphi 0, %s17
    %s21 = sphi 0, %s18
    %s22 = sphi 0, %s19
    %s23 = sphi 0, %s20
    %s24 = sphi 0, %s21
    %s25 = sphi 0, %s22
    %s41 = sphi 0, %s43
    %s44 = sphi 0, %s41
    %s45 = sphi 0, %s44
    %s61 = sphi 0, %s45
    %s69 = sphi 0, %s71
    %s72 = sphi 0, %s69
    %s73 = sphi 0, %s72
    %s89 = sphi 0, %s73
    %s97 = sphi 0, %s99
    %s100 = sphi 0, %s97
    %s101 = sphi 0, %s100
    %s117 = sphi 0, %s101
    %s125 = sphi 0, %s127
    %s128 = sphi 0, %s125
    %s129 = sphi 0, %s128
    %s145 = sphi 0, %s129
  $region4: #{down_block_comp.5} parent=0 // loop_header_branch
    %13 = sbr.rel (%p11) target = $region8
  $region5: #{down_block_comp.5} parent=0 // loop_body
    %s15 = ssub.s32 %s10, 1
    %s16 = ssub.s32 %s10, 2
    %s26 = sadd.s32 1, %s19
    %p27 = scmp.ge.s32.totalorder %s26, 1
    %s28 = scalar_select %p27, 0, %s26
    %s29 = sadd.s32 1, %s18
    %s30 = scalar_select %p27, %s29, %s18
    %p31 = scmp.ge.s32.totalorder %s30, 1
    %s32 = scalar_select %p31, 0, %s30
    %s33 = sadd.s32 1, %s17
    %s34 = scalar_select %p31, %s33, %s17
    %p35 = scmp.ge.s32.totalorder %s34, 2
    %s36 = scalar_select %p35, 0, %s34
    %s37 = ssub.s32 %s17, %s36
    %s38 = ssub.s32 %s19, %s28
    %s39 = sor.u32 %s37, %s38
    %p40 = scmp.eq.s32.totalorder %s39, 0
    %s42 = sadd.s32 %s41, 1
    %s43 = scalar_select %p40, %s41, %s42
    %p46 = pneg %p40
    %p47 = scmp.eq.s32.totalorder %s10, 1
    %p48 = por %p46, %p47
    %p49 = scmp.ne.s32.totalorder %s41, %s44
    %p50 = scmp.eq.s32.totalorder %s10, 0
    %p51 = por %p49, %p50
    %p52 = scmp.ne.s32.totalorder %s41, %s44
    %p53 = scmp.eq.s32.totalorder %s15, 1
    %p54 = por %p52, %p53
    %p55 = scmp.ne.s32.totalorder %s44, %s45
    %p56 = scmp.eq.s32.totalorder %s15, 0
    %p57 = por %p55, %p56
    %p58 = scmp.ne.s32.totalorder %s44, %s45
    %p59 = scmp.eq.s32.totalorder %s16, 1
    %p60 = por %p58, %p59
    %p62 = scmp.ne.s32.totalorder %s45, %s61
    %p63 = scmp.eq.s32.totalorder %s16, 0
    %p64 = por %p62, %p63
    %s65 = ssub.s32 %s19, %s28
    %s66 = ssub.s32 %s18, %s32
    %s67 = sor.u32 %s65, %s66
    %p68 = scmp.eq.s32.totalorder %s67, 0
    %s70 = sadd.s32 %s69, 1
    %s71 = scalar_select %p68, %s69, %s70
    %p74 = pneg %p68
    %p75 = scmp.eq.s32.totalorder %s10, 1
    %p76 = por %p74, %p75
    %p77 = scmp.ne.s32.totalorder %s69, %s72
    %p78 = scmp.eq.s32.totalorder %s10, 0
    %p79 = por %p77, %p78
    %p80 = scmp.ne.s32.totalorder %s69, %s72
    %p81 = scmp.eq.s32.totalorder %s15, 1
    %p82 = por %p80, %p81
    %p83 = scmp.ne.s32.totalorder %s72, %s73
    %p84 = scmp.eq.s32.totalorder %s15, 0
    %p85 = por %p83, %p84
    %p86 = scmp.ne.s32.totalorder %s72, %s73
    %p87 = scmp.eq.s32.totalorder %s16, 1
    %p88 = por %p86, %p87
    %p90 = scmp.ne.s32.totalorder %s73, %s89
    %p91 = scmp.eq.s32.totalorder %s16, 0
    %p92 = por %p90, %p91
    %s93 = ssub.s32 %s17, %s36
    %s94 = ssub.s32 %s18, %s32
    %s95 = sor.u32 %s93, %s94
    %p96 = scmp.eq.s32.totalorder %s95, 0
    %s98 = sadd.s32 %s97, 1
    %s99 = scalar_select %p96, %s97, %s98
    %p102 = pneg %p96
    %p103 = scmp.eq.s32.totalorder %s10, 1
    %p104 = por %p102, %p103
    %p105 = scmp.ne.s32.totalorder %s97, %s100
    %p106 = scmp.eq.s32.totalorder %s10, 0
    %p107 = por %p105, %p106
    %p108 = scmp.ne.s32.totalorder %s97, %s100
    %p109 = scmp.eq.s32.totalorder %s15, 1
    %p110 = por %p108, %p109
    %p111 = scmp.ne.s32.totalorder %s100, %s101
    %p112 = scmp.eq.s32.totalorder %s15, 0
    %p113 = por %p111, %p112
    %p114 = scmp.ne.s32.totalorder %s100, %s101
    %p115 = scmp.eq.s32.totalorder %s16, 1
    %p116 = por %p114, %p115
    %p118 = scmp.ne.s32.totalorder %s101, %s117
    %p119 = scmp.eq.s32.totalorder %s16, 0
    %p120 = por %p118, %p119
    %s121 = ssub.s32 %s17, %s36
    %s122 = ssub.s32 %s18, %s32
    %s123 = sor.u32 %s121, %s122
    %p124 = scmp.eq.s32.totalorder %s123, 0
    %s126 = sadd.s32 %s125, 1
    %s127 = scalar_select %p124, %s125, %s126
    %p130 = pneg %p124
    %p131 = scmp.eq.s32.totalorder %s10, 1
    %p132 = por %p130, %p131
    %p133 = scmp.ne.s32.totalorder %s125, %s128
    %p134 = scmp.eq.s32.totalorder %s10, 0
    %p135 = por %p133, %p134
    %p136 = scmp.ne.s32.totalorder %s125, %s128
    %p137 = scmp.eq.s32.totalorder %s15, 1
    %p138 = por %p136, %p137
    %p139 = scmp.ne.s32.totalorder %s128, %s129
    %p140 = scmp.eq.s32.totalorder %s15, 0
    %p141 = por %p139, %p140
    %p142 = scmp.ne.s32.totalorder %s128, %s129
    %p143 = scmp.eq.s32.totalorder %s16, 1
    %p144 = por %p142, %p143
    %p146 = scmp.ne.s32.totalorder %s129, %s145
    %p147 = scmp.eq.s32.totalorder %s16, 0
    %p148 = por %p146, %p147
    %p149 = scmp.le.s32.totalorder 1, %s10
    %p150 = scmp.lt.s32.totalorder %s10, 3
    %p151 = pnand %p149, %p150
    %p152 = pneg %p151
    // Predicated region
    $region9: #{down_block_comp.5} parent=5 // pred_check
      _
    $region10: #{down_block_comp.5} parent=5 // pred_check_branch
      %154 = sbr.rel (%p151) target = $region12
    $region11: #{down_block_comp.5} parent=5 // pred_region
      %s155 = ssub.s32 %s10, 1
      // Predicated region
      $region13: #{down_block_comp.5} parent=11 // pred_check
        %p156 = pneg %p85
      $region14: #{down_block_comp.5} parent=11 // pred_check_branch
        %158 = sbr.rel (%p156) target = $region16
      $region15: #{down_block_comp.5} parent=11 // pred_region
        %s159 = smul.u32 16, %s22
        %p160 = scmp.lt.s32.totalorder %s159, 15
        %s161 = scalar_select %p160, %s159, 15
        %p162 = scmp.lt.s32.totalorder %s21, 0
        %s163 = scalar_select %p162, %s21, 0
        %s164 = sadd.s32 %s163, %s161
        %s165 = smul.addr %s164, 4
        %s166 = scalar_lea.vmem %s1, %s165
        %s167 = smul.u32 16, %s22
      $region16: #{down_block_comp.5} parent=11 // pred_fallthru
        _
    $region12: #{down_block_comp.5} parent=5 // pred_fallthru
      _
    %p168 = scmp.lt.s32.totalorder %s10, 2
    // Predicated region
    $region17: #{down_block_comp.5} parent=5 // pred_check
      %p169 = pneg %p168
    $region18: #{down_block_comp.5} parent=5 // pred_check_branch
      %171 = sbr.rel (%p169) target = $region20
    $region19: #{down_block_comp.5} parent=5 // pred_region
      // Predicated region
      $region21: #{down_block_comp.5} parent=19 // pred_check
        %p172 = pneg %p51
      $region22: #{down_block_comp.5} parent=19 // pred_check_branch
        %174 = sbr.rel (%p172) target = $region24
      $region23: #{down_block_comp.5} parent=19 // pred_region
        %s175 = smul.u32 8, %s17
        %p176 = scmp.lt.s32.totalorder %s175, 15
        %s177 = scalar_select %p176, %s175, 15
        %p178 = scmp.lt.s32.totalorder %s19, 0
        %s179 = scalar_select %p178, %s19, 0
        %s180 = sadd.s32 %s179, %s177
        %s181 = smul.addr %s180, 4
        %s182 = scalar_lea.vmem %s0, %s181
        %s183 = smul.u32 8, %s17
      $region24: #{down_block_comp.5} parent=19 // pred_fallthru
        _
    $region20: #{down_block_comp.5} parent=5 // pred_fallthru
      _
    %p184 = scmp.le.s32.totalorder 1, %s10
    %p185 = scmp.lt.s32.totalorder %s10, 3
    %p186 = pnand %p184, %p185
    %p187 = pneg %p186
    // Predicated region
    $region25: #{down_block_comp.5} parent=5 // pred_check
      _
    $region26: #{down_block_comp.5} parent=5 // pred_check_branch
      %189 = sbr.rel (%p186) target = $region28
    $region27: #{down_block_comp.5} parent=5 // pred_region
      %s190 = ssub.s32 %s10, 1
      %s191 = smul.u32 8, %s20
      %p192 = scmp.lt.s32.totalorder %s191, 15
      %s193 = scalar_select %p192, %s191, 15
      %p194 = scmp.lt.s32.totalorder %s22, 0
      %s195 = scalar_select %p194, %s22, 0
      %s196 = sadd.s32 %s195, %s193
      %s197 = smul.addr %s196, 4
      %s198 = scalar_lea.vmem %s0, %s197
      %p199 = pneg %p57
      %p200 = pneg %p54
      %s201 = smul.u32 16, %s22
      %p202 = scmp.lt.s32.totalorder %s201, 15
      %s203 = scalar_select %p202, %s201, 15
      %p204 = scmp.lt.s32.totalorder %s21, 0
      %s205 = scalar_select %p204, %s21, 0
      %s206 = sadd.s32 %s205, %s203
      %s207 = smul.addr %s206, 4
      %s208 = scalar_lea.vmem %s1, %s207
      %p209 = pneg %p85
      %p210 = pneg %p82
      %p211 = pneg %p113
      %p212 = pneg %p110
      %s213 = smul.u32 8, %s20
      %p214 = scmp.lt.s32.totalorder %s213, 15
      %s215 = scalar_select %p214, %s213, 15
      %p216 = scmp.lt.s32.totalorder %s21, 0
      %s217 = scalar_select %p216, %s21, 0
      %s218 = sadd.s32 %s217, %s215
      %s219 = smul.addr %s218, 4
      %s220 = scalar_lea.vmem %s2, %s219
      %p221 = pneg %p141
      %p222 = pneg %p138
      %p223 = scmp.lt.s32.totalorder %s20, 1
      %s224 = scalar_select %p223, %s20, 1
      %p225 = scmp.lt.s32.totalorder %s21, 0
      %s226 = scalar_select %p225, %s21, 0
      %s227 = sadd.s32 %s226, %s224
      %s228 = smul.addr %s227, 2
      %s229 = scalar_lea.vmem %s3, %s228
      %s230 = smul.u32 8, %s20
      %p231 = scmp.lt.s32.totalorder %s230, 15
      %s232 = scalar_select %p231, %s230, 15
      %p233 = scmp.lt.s32.totalorder %s22, 0
      %s234 = scalar_select %p233, %s22, 0
      %s235 = sadd.s32 %s234, %s232
      %s236 = smul.addr %s235, 4
      %s237 = scalar_lea.vmem %s0, %s236
      %s238 = smul.u32 8, %s20
      %s239 = smul.u32 16, %s22
      %p240 = scmp.lt.s32.totalorder %s239, 15
      %s241 = scalar_select %p240, %s239, 15
      %p242 = scmp.lt.s32.totalorder %s21, 0
      %s243 = scalar_select %p242, %s21, 0
      %s244 = sadd.s32 %s243, %s241
      %s245 = smul.addr %s244, 4
      %s246 = scalar_lea.vmem %s1, %s245
      %s247 = smul.u32 16, %s22
      %s248 = smul.u32 8, %s20
      %p249 = scmp.lt.s32.totalorder %s248, 15
      %s250 = scalar_select %p249, %s248, 15
      %p251 = scmp.lt.s32.totalorder %s21, 0
      %s252 = scalar_select %p251, %s21, 0
      %s253 = sadd.s32 %s252, %s250
      %s254 = smul.addr %s253, 4
      %s255 = scalar_lea.vmem %s2, %s254
      %s256 = smul.u32 8, %s20
      %p257 = scmp.lt.s32.totalorder %s20, 1
      %s258 = scalar_select %p257, %s20, 1
      %p259 = scmp.lt.s32.totalorder %s21, 0
      %s260 = scalar_select %p259, %s21, 0
      %s261 = sadd.s32 %s260, %s258
      %s262 = smul.addr %s261, 2
      %s263 = scalar_lea.vmem %s3, %s262
      %p265 = scmp.eq.s32.totalorder %s22, 0
      // Predicated region
      $region29: #{down_block_comp.5} parent=27 // pred_check
        %p266 = pneg %p265
      $region30: #{down_block_comp.5} parent=27 // pred_check_branch
        %268 = sbr.rel (%p266) target = $region32
      $region31: #{down_block_comp.5} parent=27 // pred_region
        %269 = vst [vmem:[#allocation2] sm:$0xff] 0.0
        %270 = vst [vmem:[#allocation2 + $0x8] sm:$0xff] 0.0
        %271 = vst [vmem:[#allocation2 + $0x10] sm:$0xff] 0.0
        %272 = vst [vmem:[#allocation2 + $0x18] sm:$0xff] 0.0
        %273 = vst [vmem:[#allocation2 + $0x20] sm:$0xff] 0.0
        %274 = vst [vmem:[#allocation2 + $0x28] sm:$0xff] 0.0
        %275 = vst [vmem:[#allocation2 + $0x30] sm:$0xff] 0.0
        %276 = vst [vmem:[#allocation2 + $0x38] sm:$0xff] 0.0
      $region32: #{down_block_comp.5} parent=27 // pred_fallthru
        _
      %v277 = vld [vmem:[#allocation2] sm:$0xff]
      %v278 = vld [vmem:[#allocation2 + $0x8] sm:$0xff]
      %v279 = vld [vmem:[#allocation2 + $0x10] sm:$0xff]
      %v280 = vld [vmem:[#allocation2 + $0x18] sm:$0xff]
      %v281 = vld [vmem:[#allocation2 + $0x20] sm:$0xff]
      %v282 = vld [vmem:[#allocation2 + $0x28] sm:$0xff]
      %v283 = vld [vmem:[#allocation2 + $0x30] sm:$0xff]
      %v284 = vld [vmem:[#allocation2 + $0x38] sm:$0xff]
      %v285 = vld [vmem:[%s237] sm:$0xf]
      %v286 = vld [vmem:[%s237 + $0x4] sm:$0xf]
      %v287 = vld [vmem:[%s237 + $0x8] sm:$0xf]
      %v288 = vld [vmem:[%s237 + $0xc] sm:$0xf]
      %v289 = vld [vmem:[%s237 + $0x10] sm:$0xf]
      %v290 = vld [vmem:[%s237 + $0x14] sm:$0xf]
      %v291 = vld [vmem:[%s237 + $0x18] sm:$0xf]
      %v292 = vld [vmem:[%s237 + $0x1c] sm:$0xf]
      %v293 = vld [vmem:[%s246] sm:$0xf]
      %v294 = vld [vmem:[%s246 + $0x4] sm:$0xf]
      %v295 = vld [vmem:[%s246 + $0x8] sm:$0xf]
      %v296 = vld [vmem:[%s246 + $0xc] sm:$0xf]
      %v297 = vld [vmem:[%s246 + $0x10] sm:$0xf]
      %v298 = vld [vmem:[%s246 + $0x14] sm:$0xf]
      %v299 = vld [vmem:[%s246 + $0x18] sm:$0xf]
      %v300 = vld [vmem:[%s246 + $0x1c] sm:$0xf]
      %v301 = vld [vmem:[%s246 + $0x20] sm:$0xf]
      %v302 = vld [vmem:[%s246 + $0x24] sm:$0xf]
      %v303 = vld [vmem:[%s246 + $0x28] sm:$0xf]
      %v304 = vld [vmem:[%s246 + $0x2c] sm:$0xf]
      %v305 = vld [vmem:[%s246 + $0x30] sm:$0xf]
      %v306 = vld [vmem:[%s246 + $0x34] sm:$0xf]
      %v307 = vld [vmem:[%s246 + $0x38] sm:$0xf]
      %v308 = vld [vmem:[%s246 + $0x3c] sm:$0xf]
      %v317 = vunpack.c.l.b16 %v285
      %v318 = vunpack.c.l.b16 %v286
      %v319 = vunpack.c.l.b16 %v287
      %v320 = vunpack.c.l.b16 %v288
      %v321 = vunpack.c.l.b16 %v289
      %v322 = vunpack.c.l.b16 %v290
      %v323 = vunpack.c.l.b16 %v291
      %v324 = vunpack.c.l.b16 %v292
      %v325 = vpack.c.b16 %v318, %v317
      %v326 = vpack.c.b16 %v320, %v319
      %v327 = vpack.c.b16 %v322, %v321
      %v328 = vpack.c.b16 %v324, %v323
      %v349 = vunpack.c.l.b16 %v293
      %v350 = vunpack.c.l.b16 %v294
      %v351 = vunpack.c.l.b16 %v295
      %v352 = vunpack.c.l.b16 %v296
      %v353 = vunpack.c.l.b16 %v297
      %v354 = vunpack.c.l.b16 %v298
      %v355 = vunpack.c.l.b16 %v299
      %v356 = vunpack.c.l.b16 %v300
      %v357 = vunpack.c.l.b16 %v301
      %v358 = vunpack.c.l.b16 %v302
      %v359 = vunpack.c.l.b16 %v303
      %v360 = vunpack.c.l.b16 %v304
      %v361 = vunpack.c.l.b16 %v305
      %v362 = vunpack.c.l.b16 %v306
      %v363 = vunpack.c.l.b16 %v307
      %v364 = vunpack.c.l.b16 %v308
      %v365 = vpack.c.b16 %v350, %v349
      %v366 = vpack.c.b16 %v352, %v351
      %v367 = vpack.c.b16 %v354, %v353
      %v368 = vpack.c.b16 %v356, %v355
      %v369 = vpack.c.b16 %v358, %v357
      %v370 = vpack.c.b16 %v360, %v359
      %v371 = vpack.c.b16 %v362, %v361
      %v372 = vpack.c.b16 %v364, %v363
      %381 = vmatprep.subr.bf16.mxu0 0
      %382 = vmatpush1.bf16.msra.mxu0 %v365
      %383 = vmatprep.subr.bf16.mxu0 0
      %384 = vmatpush1.bf16.msra.mxu0 %v366
      %385 = vmatprep.subr.bf16.mxu0 0
      %386 = vmatpush1.bf16.msra.mxu0 %v367
      %387 = vmatprep.subr.bf16.mxu0 0
      %388 = vmatpush1.bf16.msra.mxu0 %v368
      %389 = vmatprep.subr.bf16.mxu0 0
      %390 = vmatpush1.bf16.msra.mxu0 %v369
      %391 = vmatprep.subr.bf16.mxu0 0
      %392 = vmatpush1.bf16.msra.mxu0 %v370
      %393 = vmatprep.subr.bf16.mxu0 0
      %394 = vmatpush1.bf16.msra.mxu0 %v371
      %395 = vmatprep.subr.bf16.mxu0 0
      %396 = vmatpush1.bf16.msra.mxu0 %v372
      %397 = vmatprep.subr.bf16.mxu0 0
      %398 = vmatpush1.bf16.msra.mxu0 0
      %399 = vmatprep.subr.bf16.mxu0 0
      %400 = vmatpush1.bf16.msra.mxu0 0
      %401 = vmatprep.subr.bf16.mxu0 0
      %402 = vmatpush1.bf16.msra.mxu0 0
      %403 = vmatprep.subr.bf16.mxu0 0
      %404 = vmatpush1.bf16.msra.mxu0 0
      %405 = vmatprep.subr.bf16.mxu0 0
      %406 = vmatpush1.bf16.msra.mxu0 0
      %407 = vmatprep.subr.bf16.mxu0 0
      %408 = vmatpush1.bf16.msra.mxu0 0
      %409 = vmatprep.subr.bf16.mxu0 0
      %410 = vmatpush1.bf16.msra.mxu0 0
      %411 = vmatprep.subr.bf16.mxu0 0
      %412 = vmatpush1.bf16.msra.mxu0 0
      %413 = vmatprep.mubr.bf16.mxu0 0
      %414 = vmatmul.mubr.bf16.gmra.mrb[0].mxu0 %v325
      %v415 = vpop.f32.mrb[0].mxu0
      %v416 = vadd.f32 0.0, %v415
      %v417 = vpop.f32.mrb[0].mxu0
      %v418 = vpop.f32.mrb[0].mxu0
      %v419 = vadd.f32 0.0, %v418
      %v420 = vpop.f32.mrb[0].mxu0
      %421 = vmatprep.mubr.bf16.mxu0 0
      %422 = vmatmul.mubr.bf16.gmra.mrb[0].mxu0 %v326
      %v423 = vpop.f32.mrb[0].mxu0
      %v424 = vadd.f32 0.0, %v423
      %v425 = vpop.f32.mrb[0].mxu0
      %v426 = vpop.f32.mrb[0].mxu0
      %v427 = vadd.f32 0.0, %v426
      %v428 = vpop.f32.mrb[0].mxu0
      %429 = vmatprep.mubr.bf16.mxu0 0
      %430 = vmatmul.mubr.bf16.gmra.mrb[0].mxu0 %v327
      %v431 = vpop.f32.mrb[0].mxu0
      %v432 = vadd.f32 0.0, %v431
      %v433 = vpop.f32.mrb[0].mxu0
      %v434 = vpop.f32.mrb[0].mxu0
      %v435 = vadd.f32 0.0, %v434
      %v436 = vpop.f32.mrb[0].mxu0
      %437 = vmatprep.mubr.bf16.mxu0 0
      %438 = vmatmul.mubr.bf16.gmra.mrb[0].mxu0 %v328
      %v439 = vpop.f32.mrb[0].mxu0
      %v440 = vadd.f32 0.0, %v439
      %v441 = vpop.f32.mrb[0].mxu0
      %v442 = vpop.f32.mrb[0].mxu0
      %v443 = vadd.f32 0.0, %v442
      %v444 = vpop.f32.mrb[0].mxu0
      %445 = vdwg.mxu0
      %v446 = vadd.f32 %v277, %v416
      %v447 = vadd.f32 %v278, %v419
      %v448 = vadd.f32 %v279, %v424
      %v449 = vadd.f32 %v280, %v427
      %v450 = vadd.f32 %v281, %v432
      %v451 = vadd.f32 %v282, %v435
      %v452 = vadd.f32 %v283, %v440
      %v453 = vadd.f32 %v284, %v443
      %454 = vst [vmem:[#allocation2] sm:$0xff] %v446
      %455 = vst [vmem:[#allocation2 + $0x8] sm:$0xff] %v447
      %456 = vst [vmem:[#allocation2 + $0x10] sm:$0xff] %v448
      %457 = vst [vmem:[#allocation2 + $0x18] sm:$0xff] %v449
      %458 = vst [vmem:[#allocation2 + $0x20] sm:$0xff] %v450
      %459 = vst [vmem:[#allocation2 + $0x28] sm:$0xff] %v451
      %460 = vst [vmem:[#allocation2 + $0x30] sm:$0xff] %v452
      %461 = vst [vmem:[#allocation2 + $0x38] sm:$0xff] %v453
      // Predicated region
      $region33: #{down_block_comp.5} parent=27 // pred_check
        %p462 = pneg %p265
      $region34: #{down_block_comp.5} parent=27 // pred_check_branch
        %464 = sbr.rel (%p462) target = $region36
      $region35: #{down_block_comp.5} parent=27 // pred_region
        %v465 = vld [vmem:[#allocation2] sm:$0xff]
        %v466 = vld [vmem:[#allocation2 + $0x8] sm:$0xff]
        %v467 = vld [vmem:[#allocation2 + $0x10] sm:$0xff]
        %v468 = vld [vmem:[#allocation2 + $0x18] sm:$0xff]
        %v469 = vld [vmem:[#allocation2 + $0x20] sm:$0xff]
        %v470 = vld [vmem:[#allocation2 + $0x28] sm:$0xff]
        %v471 = vld [vmem:[#allocation2 + $0x30] sm:$0xff]
        %v472 = vld [vmem:[#allocation2 + $0x38] sm:$0xff]
        %v473 = vpack.c.bf16 %v466, %v465
        %v474 = vpack.c.bf16 %v468, %v467
        %v475 = vpack.c.bf16 %v470, %v469
        %v476 = vpack.c.bf16 %v472, %v471
        %v481 = vunpack.c.l.b16 %v473
        %v482 = vunpack.c.h.b16 %v473
        %v483 = vunpack.c.l.b16 %v474
        %v484 = vunpack.c.h.b16 %v474
        %v485 = vunpack.c.l.b16 %v475
        %v486 = vunpack.c.h.b16 %v475
        %v487 = vunpack.c.l.b16 %v476
        %v488 = vunpack.c.h.b16 %v476
        %v489 = vpack.c.b16 %v481, %v481
        %v490 = vpack.c.b16 %v482, %v482
        %v491 = vpack.c.b16 %v483, %v483
        %v492 = vpack.c.b16 %v484, %v484
        %v493 = vpack.c.b16 %v485, %v485
        %v494 = vpack.c.b16 %v486, %v486
        %v495 = vpack.c.b16 %v487, %v487
        %v496 = vpack.c.b16 %v488, %v488
        %505 = vst [vmem:[%s255] sm:$0xf] %v489
        %506 = vst [vmem:[%s255 + $0x4] sm:$0xf] %v490
        %507 = vst [vmem:[%s255 + $0x8] sm:$0xf] %v491
        %508 = vst [vmem:[%s255 + $0xc] sm:$0xf] %v492
        %509 = vst [vmem:[%s255 + $0x10] sm:$0xf] %v493
        %510 = vst [vmem:[%s255 + $0x14] sm:$0xf] %v494
        %511 = vst [vmem:[%s255 + $0x18] sm:$0xf] %v495
        %512 = vst [vmem:[%s255 + $0x1c] sm:$0xf] %v496
        %v513 = vadd.f32 %v465, %v466
        %v514 = vadd.f32 %v513, %v467
        %v515 = vadd.f32 %v514, %v468
        %v516 = vadd.f32 %v515, %v469
        %v517 = vadd.f32 %v516, %v470
        %v518 = vadd.f32 %v517, %v471
        %v519 = vadd.f32 %v518, %v472
        %v520 = vrot.slane %v519, 4
        %v521 = vadd.f32 %v519, %v520
        %v522 = vrot.slane %v521, 2
        %v523 = vadd.f32 %v521, %v522
        %v524 = vrot.slane %v523, 1
        %v525 = vadd.f32 %v523, %v524
        %v526 = vmul.f32 %v465, %v465
        %v527 = vmul.f32 %v466, %v466
        %v528 = vmul.f32 %v467, %v467
        %v529 = vmul.f32 %v468, %v468
        %v530 = vmul.f32 %v469, %v469
        %v531 = vmul.f32 %v470, %v470
        %v532 = vmul.f32 %v471, %v471
        %v533 = vmul.f32 %v472, %v472
        %v534 = vadd.f32 %v526, %v527
        %v535 = vadd.f32 %v534, %v528
        %v536 = vadd.f32 %v535, %v529
        %v537 = vadd.f32 %v536, %v530
        %v538 = vadd.f32 %v537, %v531
        %v539 = vadd.f32 %v538, %v532
        %v540 = vadd.f32 %v539, %v533
        %v541 = vrot.slane %v540, 4
        %v542 = vadd.f32 %v540, %v541
        %v543 = vrot.slane %v542, 2
        %v544 = vadd.f32 %v542, %v543
        %v545 = vrot.slane %v544, 1
        %v546 = vadd.f32 %v544, %v545
        %vm547 = vcmask 1040384
        %v548 = vsel %vm547, %v525, %v546
        %549 = vst [vmem:[%s263] sm:$0x3] %v548
      $region36: #{down_block_comp.5} parent=27 // pred_fallthru
        _
      %s550 = smul.u32 8, %s20
      %p551 = scmp.lt.s32.totalorder %s550, 15
      %s552 = scalar_select %p551, %s550, 15
      %p553 = scmp.lt.s32.totalorder %s21, 0
      %s554 = scalar_select %p553, %s21, 0
      %s555 = sadd.s32 %s554, %s552
      %s556 = smul.addr %s555, 4
      %s557 = scalar_lea.vmem %s2, %s556
      %p558 = scmp.lt.s32.totalorder %s20, 1
      %s559 = scalar_select %p558, %s20, 1
      %p560 = scmp.lt.s32.totalorder %s21, 0
      %s561 = scalar_select %p560, %s21, 0
      %s562 = sadd.s32 %s561, %s559
      %s563 = smul.addr %s562, 2
      %s564 = scalar_lea.vmem %s3, %s563
      // Predicated region
      $region37: #{down_block_comp.5} parent=27 // pred_check
        %p565 = pneg %p110
      $region38: #{down_block_comp.5} parent=27 // pred_check_branch
        %567 = sbr.rel (%p565) target = $region40
      $region39: #{down_block_comp.5} parent=27 // pred_region
        %s568 = smul.u32 8, %s20
      $region40: #{down_block_comp.5} parent=27 // pred_fallthru
        _
      // Predicated region
      $region41: #{down_block_comp.5} parent=27 // pred_check
        %p569 = pneg %p138
      $region42: #{down_block_comp.5} parent=27 // pred_check_branch
        %571 = sbr.rel (%p569) target = $region44
      $region43: #{down_block_comp.5} parent=27 // pred_region
        _
      $region44: #{down_block_comp.5} parent=27 // pred_fallthru
        _
    $region28: #{down_block_comp.5} parent=5 // pred_fallthru
      _
    %p572 = scmp.le.s32.totalorder 2, %s10
    // Predicated region
    $region45: #{down_block_comp.5} parent=5 // pred_check
      %p573 = pneg %p572
    $region46: #{down_block_comp.5} parent=5 // pred_check_branch
      %575 = sbr.rel (%p573) target = $region48
    $region47: #{down_block_comp.5} parent=5 // pred_region
      %s576 = ssub.s32 %s10, 2
      // Predicated region
      $region49: #{down_block_comp.5} parent=47 // pred_check
        %p577 = pneg %p116
      $region50: #{down_block_comp.5} parent=47 // pred_check_branch
        %579 = sbr.rel (%p577) target = $region52
      $region51: #{down_block_comp.5} parent=47 // pred_region
        %s580 = smul.u32 8, %s23
        %p581 = scmp.lt.s32.totalorder %s580, 15
        %s582 = scalar_select %p581, %s580, 15
        %p583 = scmp.lt.s32.totalorder %s24, 0
        %s584 = scalar_select %p583, %s24, 0
        %s585 = sadd.s32 %s584, %s582
        %s586 = smul.addr %s585, 4
        %s587 = scalar_lea.vmem %s2, %s586
      $region52: #{down_block_comp.5} parent=47 // pred_fallthru
        _
      // Predicated region
      $region53: #{down_block_comp.5} parent=47 // pred_check
        %p588 = pneg %p144
      $region54: #{down_block_comp.5} parent=47 // pred_check_branch
        %590 = sbr.rel (%p588) target = $region56
      $region55: #{down_block_comp.5} parent=47 // pred_region
        %p591 = scmp.lt.s32.totalorder %s23, 1
        %s592 = scalar_select %p591, %s23, 1
        %p593 = scmp.lt.s32.totalorder %s24, 0
        %s594 = scalar_select %p593, %s24, 0
        %s595 = sadd.s32 %s594, %s592
        %s596 = smul.addr %s595, 2
        %s597 = scalar_lea.vmem %s3, %s596
      $region56: #{down_block_comp.5} parent=47 // pred_fallthru
        _
    $region48: #{down_block_comp.5} parent=5 // pred_fallthru
      _
  $region6: #{down_block_comp.5} parent=0 // loop_footer
    %s14 = sadd.s32 1, %s10
  $region7: #{down_block_comp.5} parent=0 // loop_footer_branch
    %9 = sbr.rel target = $region3
  $region8: #{down_block_comp.5} parent=0 // loop_exit
    _

// kernel: down_block_comp.9
$region0: #{down_block_comp.9}
  #allocation0 [shape = 'u32[]', space=smem, size = 0x4, offset = 0x4, fixed_abs, tag = 'smem constant byte address 0x4 - core index']
  #allocation1 [shape = 'u32[144,128]{1,0:T(1,128)}', space=vmem, size = 0x12000, scoped, tag = 'internal scratch']
  %s0 = inlined_call_operand.vmem [shape: bf16[8,128], index: 0, kind: input, shape index: {}]
  %s1 = inlined_call_operand.vmem [shape: bf16[8,128], index: 1, kind: input, shape index: {}]
  %s2 = inlined_call_operand.vmem [shape: f32[4,128], index: 2, kind: input, shape index: {}]
  %s3 = inlined_call_operand.vmem [shape: f32[8,128], index: 3, kind: output, shape index: {}]
  %s4 = sld [smem:[#allocation0]]
  $region22: #{down_block_comp.9} parent=0
    _
  %s6 = ssub.s32 1, %s4
  %s7 = scalar_select 0, %s6, %s4
  // Predicated region
  $region2: #{down_block_comp.9} parent=0 // pred_check
    _
  $region3: #{down_block_comp.9} parent=0 // pred_check_branch
    %9 = sbr.rel (0) target = $region5
  $region4: #{down_block_comp.9} parent=0 // pred_region
    _
  $region5: #{down_block_comp.9} parent=0 // pred_fallthru
    _
  // Predicated region
  $region6: #{down_block_comp.9} parent=0 // pred_check
    _
  $region7: #{down_block_comp.9} parent=0 // pred_check_branch
    %11 = sbr.rel (0) target = $region9
  $region8: #{down_block_comp.9} parent=0 // pred_region
    _
  $region9: #{down_block_comp.9} parent=0 // pred_fallthru
    _
  // Predicated region
  $region10: #{down_block_comp.9} parent=0 // pred_check
    _
  $region11: #{down_block_comp.9} parent=0 // pred_check_branch
    %13 = sbr.rel (0) target = $region13
  $region12: #{down_block_comp.9} parent=0 // pred_region
    _
  $region13: #{down_block_comp.9} parent=0 // pred_fallthru
    _
  %v14 = vld [vmem:[%s2] sm:$0xf]
  %v15 = vld [vmem:[%s0] sm:$0xf]
  %v16 = vunpack.c.l.bf16 %v15
  %v17 = vlaneseq
  %v18 = vshrl.u32 %v17, 7
  %v19 = vsub.s32 0, %v18
  %v20 = vrot.slane %v14, %v19
  %v21 = vmul.f32 %v16, %v20
  %v22 = vlaneseq
  %v23 = vshrl.u32 %v22, 7
  %v24 = vsub.s32 1, %v23
  %v25 = vrot.slane %v14, %v24
  %v26 = vadd.f32 %v21, %v25
  %vm27 = vcmp.ge.f32.partialorder %v26, 0.0
  %v28 = vmul.f32 %v26, 0.2
  %v29 = vsel %vm27, %v26, %v28
  %v30 = vld [vmem:[%s1] sm:$0xf]
  %v31 = vunpack.c.l.bf16 %v30
  %v32 = vlaneseq
  %v33 = vshrl.u32 %v32, 7
  %v34 = vsub.s32 2, %v33
  %v35 = vrot.slane %v14, %v34
  %v36 = vmul.f32 %v31, %v35
  %v37 = vlaneseq
  %v38 = vshrl.u32 %v37, 7
  %v39 = vsub.s32 3, %v38
  %v40 = vrot.slane %v14, %v39
  %v41 = vadd.f32 %v36, %v40
  %vm42 = vcmp.ge.f32.partialorder %v41, 0.0
  %v43 = vmul.f32 %v41, 0.2
  %v44 = vsel %vm42, %v41, %v43
  %v45 = vadd.f32 %v29, %v44
  %v46 = vmul.f32 %v45, 0.5
  %47 = vst [vmem:[%s3] sm:$0xff] %v46
  // Predicated region
  $region14: #{down_block_comp.9} parent=0 // pred_check
    _
  $region15: #{down_block_comp.9} parent=0 // pred_check_branch
    %49 = sbr.rel (0) target = $region17
  $region16: #{down_block_comp.9} parent=0 // pred_region
    _
  $region17: #{down_block_comp.9} parent=0 // pred_fallthru
    _
  // Predicated region
  $region18: #{down_block_comp.9} parent=0 // pred_check
    _
  $region19: #{down_block_comp.9} parent=0 // pred_check_branch
    %51 = sbr.rel (0) target = $region21
  $region20: #{down_block_comp.9} parent=0 // pred_region
    _
  $region21: #{down_block_comp.9} parent=0 // pred_fallthru
    _

</llo_original>
